<compile_context>
chip_gen: v5e
topology: v5e:2x2
jax: 0.10.0
libtpu: 0.0.40
codegen_flags: <defaults>
</compile_context>

<pallas_src>
import functools

import jax
import jax.numpy as jnp
from jax.experimental import pallas as pl
from jax.experimental.pallas import tpu as pltpu


def _round_up(x, m):
    return ((x + m - 1) // m) * m


# --------------------------------------------------------------------------------------
# Fused kernel: one batch tile goes through every layer while resident in VMEM.
# --------------------------------------------------------------------------------------
def _fused_mlp_kernel(x_ref, *refs, num_hidden, compute_dtype):
    # refs = (w0, b0, w1, b1, ..., w_tail, b_tail, o_ref)
    o_ref = refs[-1]
    wb = refs[:-1]

    h = x_ref[...]  # (TB, Din_pad), already in compute_dtype
    n_layers = num_hidden + 1
    for li in range(n_layers):
        w = wb[2 * li][...]                 # (Din_pad, Dout_pad), compute_dtype
        b = wb[2 * li + 1][...]             # (1, Dout_pad), f32 — loaded once per layer
        y = jnp.dot(h.astype(compute_dtype), w.astype(compute_dtype),
                    preferred_element_type=jnp.float32)
        y = y + b.astype(jnp.float32)       # bias add in f32
        if li < num_hidden:
            y = jnp.maximum(y, 0.0)         # hidden relu; tail has no activation
        h = y
    o_ref[...] = h.astype(o_ref.dtype)


def fused_mlp_forward(x, hidden_params, tail_params, *,
                      compute_dtype=jnp.bfloat16, block_batch=None):
    """MLPNet.forward: relu(Linear) hidden stack + Linear tail, one pallas_call."""
    B, in_dim = x.shape
    out_dim = tail_params[0].shape[1]

    layers = list(hidden_params) + [tail_params]
    dims = [in_dim] + [w.shape[1] for w, _ in layers]
    pdims = [_round_up(max(d, 1), 128) for d in dims]     # lane-dense feature dims

    # Zero-pad parameters: padded rows/cols contribute exact zeros, so padded lanes
    # stay zero through every layer and the result in the real lanes is unchanged.
    padded = []
    for li, (w, b) in enumerate(layers):
        din, dout = w.shape
        pdin, pdout = pdims[li], pdims[li + 1]
        wp = jnp.zeros((pdin, pdout), compute_dtype).at[:din, :dout].set(
            w.astype(compute_dtype))
        bp = jnp.zeros((1, pdout), jnp.float32).at[0, :dout].set(
            b.astype(jnp.float32))
        padded.append((wp, bp))

    # Generation-aware VMEM budget (v7x: 64 MiB physical; v5e/v6e: 128 MiB).
    try:
        vmem_cap = int(pltpu.get_tpu_info().vmem_capacity_bytes)
    except Exception:
        vmem_cap = 64 << 20
    vmem_budget = int(min(vmem_cap // 2, 64 << 20))

    weight_bytes = sum(w.size * w.dtype.itemsize + b.size * 4 for w, b in padded)
    max_feat = max(pdims)

    def fits(tb):
        act = 4 * tb * max_feat * 4                       # live f32 activation tiles
        io = 2 * tb * (pdims[0] + pdims[-1]) * 4          # double-buffered in/out tiles
        return weight_bytes + act + io < vmem_budget

    if block_batch is None:
        tb = 1024
        while tb > 8 and not fits(tb):
            tb //= 2
        block_batch = tb
    block_batch = max(8, _round_up(min(block_batch, _round_up(B, 8)), 8))

    Bp = _round_up(B, block_batch)
    Din_p, Dout_p = pdims[0], pdims[-1]
    xp = jnp.zeros((Bp, Din_p), compute_dtype).at[:B, :in_dim].set(
        x.astype(compute_dtype))

    num_hidden = len(hidden_params)
    kernel = functools.partial(_fused_mlp_kernel,
                               num_hidden=num_hidden,
                               compute_dtype=compute_dtype)

    wb_specs = []
    flat_params = []
    for wp, bp in padded:
        # Constant block index -> weights/biases stay resident across batch tiles.
        wb_specs.append(pl.BlockSpec(wp.shape, lambda i: (0, 0)))
        wb_specs.append(pl.BlockSpec(bp.shape, lambda i: (0, 0)))
        flat_params += [wp, bp]

    grid = (Bp // block_batch,)
    out = pl.pallas_call(
        kernel,
        out_shape=jax.ShapeDtypeStruct((Bp, Dout_p), jnp.float32),
        grid_spec=pltpu.PrefetchScalarGridSpec(
            num_scalar_prefetch=0,
            grid=grid,
            in_specs=[pl.BlockSpec((block_batch, Din_p), lambda i: (i, 0))] + wb_specs,
            out_specs=pl.BlockSpec((block_batch, Dout_p), lambda i: (i, 0)),
        ),
        compiler_params=pltpu.CompilerParams(
            dimension_semantics=("parallel",),   # batch tiles shard across TCs on v7x
            vmem_limit_bytes=vmem_budget,
        ),
    )(xp, *flat_params)

    return out[:B, :out_dim]


# --------------------------------------------------------------------------------------
# Parameter init (matches MLPNet layer shapes; xavier_uniform_ weights, PyTorch-style
# uniform biases). Weights stored (in_features, out_features) so y = x @ W + b.
# --------------------------------------------------------------------------------------
def xavier_uniform(key, fan_in, fan_out, dtype=jnp.float32):
    limit = jnp.sqrt(6.0 / (fan_in + fan_out))
    return jax.random.uniform(key, (fan_in, fan_out), dtype, -limit, limit)


def init_mlp_params(key, in_dim, hid_layers, out_dim, dtype=jnp.float32):
    dims = [in_dim] + list(hid_layers)
    params = []
    for i in range(len(dims) - 1):
        key, wk, bk = jax.random.split(key, 3)
        w = xavier_uniform(wk, dims[i], dims[i + 1], dtype)
        bound = 1.0 / jnp.sqrt(jnp.asarray(dims[i], dtype))
        b = jax.random.uniform(bk, (dims[i + 1],), dtype, -bound, bound)
        params.append((w, b))
    key, wk, bk = jax.random.split(key, 3)
    w_t = xavier_uniform(wk, dims[-1], out_dim, dtype)
    bound = 1.0 / jnp.sqrt(jnp.asarray(dims[-1], dtype))
    b_t = jax.random.uniform(bk, (out_dim,), dtype, -bound, bound)
    return params, (w_t, b_t)


# Reference that mirrors the kernel's numerics (bf16 MXU inputs, f32 accumulation).
def mlpnet_forward_ref(x, hidden_params, tail_params, compute_dtype=jnp.bfloat16):
    h = x.astype(jnp.float32)
    for w, b in hidden_params:
        y = jnp.dot(h.astype(compute_dtype), w.astype(compute_dtype),
                    preferred_element_type=jnp.float32)
        h = jnp.maximum(y + b.astype(jnp.float32), 0.0)
    w_t, b_t = tail_params
    y = jnp.dot(h.astype(compute_dtype), w_t.astype(compute_dtype),
                preferred_element_type=jnp.float32)
    return y + b_t.astype(jnp.float32)


if __name__ == "__main__":
    # Small shapes consistent with the net_spec example: hid_layers=[32], relu.
    batch, in_dim, out_dim = 2, 4, 2
    hid_layers = [32]

    key = jax.random.PRNGKey(0)
    key, xk, pk = jax.random.split(key, 3)
    x = jax.random.normal(xk, (batch, in_dim), jnp.float32)
    hidden_params, tail_params = init_mlp_params(pk, in_dim, hid_layers, out_dim)

    out = fused_mlp_forward(x, hidden_params, tail_params)
    out = jax.block_until_ready(out)

    ref = mlpnet_forward_ref(x, hidden_params, tail_params)
    assert out.shape == (batch, out_dim), out.shape
    assert jnp.allclose(out, ref, atol=1e-3, rtol=1e-3), (out, ref)

    print("KERNEL_OK")
</pallas_src>

<mosaic_0001>
module attributes {stable_mosaic.version = 11 : i64} {
  func.func @_fused_mlp_kernel(%arg0: i32, %arg1: memref<8x128xbf16, #tpu.memory_space<vmem>>, %arg2: memref<128x128xbf16, #tpu.memory_space<vmem>>, %arg3: memref<1x128xf32, #tpu.memory_space<vmem>>, %arg4: memref<128x128xbf16, #tpu.memory_space<vmem>>, %arg5: memref<1x128xf32, #tpu.memory_space<vmem>>, %arg6: memref<8x128xf32, #tpu.memory_space<vmem>>) attributes {dimension_semantics = [#tpu.dimension_semantics<parallel>], iteration_bounds = array<i64: 1>, scalar_prefetch = 0 : i64, scratch_operands = 0 : i64, tpu.core_type = #tpu.core_type<tc>, window_params = [{transform_indices = @transform_0, window_bounds = array<i64: 8, 128>}, {pipeline_mode = #tpu.pipeline_mode<synchronous>, transform_indices = @transform_1, window_bounds = array<i64: 128, 128>}, {pipeline_mode = #tpu.pipeline_mode<synchronous>, transform_indices = @transform_2, window_bounds = array<i64: 1, 128>}, {pipeline_mode = #tpu.pipeline_mode<synchronous>, transform_indices = @transform_3, window_bounds = array<i64: 128, 128>}, {pipeline_mode = #tpu.pipeline_mode<synchronous>, transform_indices = @transform_4, window_bounds = array<i64: 1, 128>}, {transform_indices = @transform_5, window_bounds = array<i64: 8, 128>}]} {
    %c0 = arith.constant 0 : index
    %c0_0 = arith.constant 0 : index
    %0 = vector.load %arg1[%c0, %c0_0] : memref<8x128xbf16, #tpu.memory_space<vmem>>, vector<8x128xbf16>
    %c0_1 = arith.constant 0 : index
    %c0_2 = arith.constant 0 : index
    %1 = vector.load %arg2[%c0_1, %c0_2] : memref<128x128xbf16, #tpu.memory_space<vmem>>, vector<128x128xbf16>
    %c0_3 = arith.constant 0 : index
    %c0_4 = arith.constant 0 : index
    %2 = vector.load %arg3[%c0_3, %c0_4] : memref<1x128xf32, #tpu.memory_space<vmem>>, vector<1x128xf32>
    %cst = arith.constant dense<0.000000e+00> : vector<8x128xf32>
    %3 = tpu.matmul %0, %1, %cst {dimension_numbers = #tpu.dot_dimension_numbers<[1], [0], [0], [1], [0, 0, 1, 1], [], []>} : vector<8x128xbf16>, vector<128x128xbf16>, vector<8x128xf32> -> vector<8x128xf32>
    %4 = vector.broadcast %2 : vector<1x128xf32> to vector<8x128xf32>
    %5 = arith.addf %3, %4 : vector<8x128xf32>
    %cst_5 = arith.constant 0.000000e+00 : f32
    %6 = vector.broadcast %cst_5 : f32 to vector<8x128xf32>
    %7 = arith.maximumf %5, %6 : vector<8x128xf32>
    %c0_6 = arith.constant 0 : index
    %c0_7 = arith.constant 0 : index
    %8 = vector.load %arg4[%c0_6, %c0_7] : memref<128x128xbf16, #tpu.memory_space<vmem>>, vector<128x128xbf16>
    %c0_8 = arith.constant 0 : index
    %c0_9 = arith.constant 0 : index
    %9 = vector.load %arg5[%c0_8, %c0_9] : memref<1x128xf32, #tpu.memory_space<vmem>>, vector<1x128xf32>
    %10 = arith.truncf %7 : vector<8x128xf32> to vector<8x128xbf16>
    %cst_10 = arith.constant dense<0.000000e+00> : vector<8x128xf32>
    %11 = tpu.matmul %10, %8, %cst_10 {dimension_numbers = #tpu.dot_dimension_numbers<[1], [0], [0], [1], [0, 0, 1, 1], [], []>} : vector<8x128xbf16>, vector<128x128xbf16>, vector<8x128xf32> -> vector<8x128xf32>
    %12 = vector.broadcast %9 : vector<1x128xf32> to vector<8x128xf32>
    %13 = arith.addf %11, %12 : vector<8x128xf32>
    %c0_11 = arith.constant 0 : index
    %c0_12 = arith.constant 0 : index
    %14 = vector.load %arg6[%c0_11, %c0_12] : memref<8x128xf32, #tpu.memory_space<vmem>>, vector<8x128xf32>
    tpu.vector_store %arg6[%c0_11, %c0_12], %13 {strides = array<i32>} : memref<8x128xf32, #tpu.memory_space<vmem>>, vector<8x128xf32>,
    return
  }
  func.func @transform_0(%arg0: i32) -> (i32, i32) {
    %c0_i32 = arith.constant 0 : i32
    %c0_i32_0 = arith.constant 0 : i32
    return %arg0, %c0_i32 : i32, i32
  }
  func.func @transform_1(%arg0: i32) -> (i32, i32) {
    %c0_i32 = arith.constant 0 : i32
    %c0_i32_0 = arith.constant 0 : i32
    %c0_i32_1 = arith.constant 0 : i32
    return %c0_i32, %c0_i32_0 : i32, i32
  }
  func.func @transform_2(%arg0: i32) -> (i32, i32) {
    %c0_i32 = arith.constant 0 : i32
    %c0_i32_0 = arith.constant 0 : i32
    %c0_i32_1 = arith.constant 0 : i32
    return %c0_i32, %c0_i32_0 : i32, i32
  }
  func.func @transform_3(%arg0: i32) -> (i32, i32) {
    %c0_i32 = arith.constant 0 : i32
    %c0_i32_0 = arith.constant 0 : i32
    %c0_i32_1 = arith.constant 0 : i32
    return %c0_i32, %c0_i32_0 : i32, i32
  }
  func.func @transform_4(%arg0: i32) -> (i32, i32) {
    %c0_i32 = arith.constant 0 : i32
    %c0_i32_0 = arith.constant 0 : i32
    %c0_i32_1 = arith.constant 0 : i32
    return %c0_i32, %c0_i32_0 : i32, i32
  }
  func.func @transform_5(%arg0: i32) -> (i32, i32) {
    %c0_i32 = arith.constant 0 : i32
    %c0_i32_0 = arith.constant 0 : i32
    return %arg0, %c0_i32 : i32, i32
  }
}

</mosaic_0001>

<llo_original>
// kernel: tpu_custom_call.1
$region0: #{tpu_custom_call.1}
  #allocation0 [shape = 'u32[]', space=smem, size = 0x4, offset = 0x4, fixed_abs, tag = 'smem constant byte address 0x4 - core index']
  #allocation1 [shape = 'u32[72,128]{1,0:T(1,128)}', space=vmem, size = 0x9000, scoped, tag = 'internal scratch']
  %s0 = inlined_call_operand.hbm [shape: bf16[8,128], index: 0, kind: input, shape index: {}]
  %s1 = inlined_call_operand.hbm [shape: bf16[128,128], index: 1, kind: input, shape index: {}]
  %s2 = inlined_call_operand.vmem [shape: f32[1,128], index: 2, kind: input, shape index: {}]
  %s3 = inlined_call_operand.hbm [shape: bf16[128,128], index: 3, kind: input, shape index: {}]
  %s4 = inlined_call_operand.vmem [shape: f32[1,128], index: 4, kind: input, shape index: {}]
  %s5 = inlined_call_operand.hbm [shape: f32[8,128], index: 5, kind: output, shape index: {}]
  %s6 = sld [smem:[#allocation0]]
  $region42: #{tpu_custom_call.1} parent=0
    _
  %s8 = ssub.s32 1, %s6
  %s9 = scalar_select 0, %s8, %s6
  $region1: #{tpu_custom_call.1} parent=0
    #allocation2 [shape = 'u8[2048]{0}', space=vmem, size = 0x800, scoped, tag = 'input window, operand 0, single buffered']
    #allocation3 [shape = 's32[1]{0}', space=sflag, size = 0x4, scoped, tag = 'scoped memory for tpu_custom_call.1']
    #allocation4 [shape = 's32[1]{0}', space=sflag, size = 0x4, scoped, tag = 'scoped memory for tpu_custom_call.1']
    #allocation5 [shape = 'u8[32768]{0}', space=vmem, size = 0x8000, scoped, tag = 'input window, operand 1, single buffered']
    #allocation6 [shape = 's32[1]{0}', space=sflag, size = 0x4, scoped, tag = 'scoped memory for tpu_custom_call.1']
    #allocation7 [shape = 'u8[32768]{0}', space=vmem, size = 0x8000, scoped, tag = 'input window, operand 3, single buffered']
    #allocation8 [shape = 'u8[4096]{0}', space=vmem, size = 0x1000, scoped, tag = 'output window, operand 0, single buffered']
    %10 = vsyncpa [#allocation3], 0
    %11 = vsyncpa [#allocation6], 0
    %12 = vsyncpa [#allocation4], 0
    // Predicated region
    $region2: #{tpu_custom_call.1} parent=1 // pred_check
      _
    $region3: #{tpu_custom_call.1} parent=1 // pred_check_branch
      %14 = sbr.rel (0) target = $region5
    $region4: #{tpu_custom_call.1} parent=1 // pred_region
      %16 = vsyncadd [#allocation3], 0
      %s18 = sshll.u32 %s0, 4
      %s19 = int_to_ptr.hbm [resolvable:$true] %s18
      %s20 = sshll.u32 [#allocation2], 4
      %s21 = int_to_ptr.vmem [resolvable:$true] %s20
      %23 = dma.hbm_to_vmem [thread:$0]  %s19, 64, %s21, [#allocation3]
    $region5: #{tpu_custom_call.1} parent=1 // pred_fallthru
      _
    // Predicated region
    $region6: #{tpu_custom_call.1} parent=1 // pred_check
      _
    $region7: #{tpu_custom_call.1} parent=1 // pred_check_branch
      %25 = sbr.rel (0) target = $region9
    $region8: #{tpu_custom_call.1} parent=1 // pred_region
      %27 = vsyncadd [#allocation6], 0
      %s28 = sshll.u32 %s1, 4
      %s29 = int_to_ptr.hbm [resolvable:$true] %s28
      %s30 = sshll.u32 [#allocation5], 4
      %s31 = int_to_ptr.vmem [resolvable:$true] %s30
      %36 = dma.hbm_to_vmem [thread:$0]  %s29, 1024, %s31, [#allocation6], 64, 64, 4
    $region9: #{tpu_custom_call.1} parent=1 // pred_fallthru
      _
    // Predicated region
    $region10: #{tpu_custom_call.1} parent=1 // pred_check
      _
    $region11: #{tpu_custom_call.1} parent=1 // pred_check_branch
      %38 = sbr.rel (0) target = $region13
    $region12: #{tpu_custom_call.1} parent=1 // pred_region
      _
    $region13: #{tpu_custom_call.1} parent=1 // pred_fallthru
      _
    // Predicated region
    $region14: #{tpu_custom_call.1} parent=1 // pred_check
      _
    $region15: #{tpu_custom_call.1} parent=1 // pred_check_branch
      %40 = sbr.rel (0) target = $region17
    $region16: #{tpu_custom_call.1} parent=1 // pred_region
      %42 = vsyncadd [#allocation6], 0
      %s43 = sshll.u32 %s3, 4
      %s44 = int_to_ptr.hbm [resolvable:$true] %s43
      %s45 = sshll.u32 [#allocation7], 4
      %s46 = int_to_ptr.vmem [resolvable:$true] %s45
      %51 = dma.hbm_to_vmem [thread:$0]  %s44, 1024, %s46, [#allocation6], 64, 64, 4
    $region17: #{tpu_custom_call.1} parent=1 // pred_fallthru
      _
    // Predicated region
    $region18: #{tpu_custom_call.1} parent=1 // pred_check
      _
    $region19: #{tpu_custom_call.1} parent=1 // pred_check_branch
      %53 = sbr.rel (0) target = $region21
    $region20: #{tpu_custom_call.1} parent=1 // pred_region
      _
    $region21: #{tpu_custom_call.1} parent=1 // pred_fallthru
      _
    // Predicated region
    $region22: #{tpu_custom_call.1} parent=1 // pred_check
      _
    $region23: #{tpu_custom_call.1} parent=1 // pred_check_branch
      %55 = sbr.rel (0) target = $region25
    $region24: #{tpu_custom_call.1} parent=1 // pred_region
      %57 = dma.done [#allocation3], 64
    $region25: #{tpu_custom_call.1} parent=1 // pred_fallthru
      _
    // Predicated region
    $region26: #{tpu_custom_call.1} parent=1 // pred_check
      _
    $region27: #{tpu_custom_call.1} parent=1 // pred_check_branch
      %59 = sbr.rel (0) target = $region29
    $region28: #{tpu_custom_call.1} parent=1 // pred_region
      %61 = dma.done [#allocation6], 1024
    $region29: #{tpu_custom_call.1} parent=1 // pred_fallthru
      _
    // Predicated region
    $region30: #{tpu_custom_call.1} parent=1 // pred_check
      _
    $region31: #{tpu_custom_call.1} parent=1 // pred_check_branch
      %63 = sbr.rel (0) target = $region33
    $region32: #{tpu_custom_call.1} parent=1 // pred_region
      %65 = dma.done [#allocation6], 1024
    $region33: #{tpu_custom_call.1} parent=1 // pred_fallthru
      _
    %v66 = vld [vmem:[#allocation2] sm:$0xf]
    %v67 = vld [vmem:[#allocation5] sm:$0xf]
    %v68 = vld [vmem:[#allocation5 + $0x4] sm:$0xf]
    %v69 = vld [vmem:[#allocation5 + $0x8] sm:$0xf]
    %v70 = vld [vmem:[#allocation5 + $0xc] sm:$0xf]
    %v71 = vld [vmem:[#allocation5 + $0x10] sm:$0xf]
    %v72 = vld [vmem:[#allocation5 + $0x14] sm:$0xf]
    %v73 = vld [vmem:[#allocation5 + $0x18] sm:$0xf]
    %v74 = vld [vmem:[#allocation5 + $0x1c] sm:$0xf]
    %v75 = vld [vmem:[#allocation5 + $0x20] sm:$0xf]
    %v76 = vld [vmem:[#allocation5 + $0x24] sm:$0xf]
    %v77 = vld [vmem:[#allocation5 + $0x28] sm:$0xf]
    %v78 = vld [vmem:[#allocation5 + $0x2c] sm:$0xf]
    %v79 = vld [vmem:[#allocation5 + $0x30] sm:$0xf]
    %v80 = vld [vmem:[#allocation5 + $0x34] sm:$0xf]
    %v81 = vld [vmem:[#allocation5 + $0x38] sm:$0xf]
    %v82 = vld [vmem:[#allocation5 + $0x3c] sm:$0xf]
    %v83 = vld [vmem:[%s2] sm:$0x1]
    %v85 = vperm.slane %v83, 0
    %v103 = vunpack.c.l.b16 %v67
    %v104 = vunpack.c.l.b16 %v68
    %v105 = vunpack.c.l.b16 %v69
    %v106 = vunpack.c.l.b16 %v70
    %v107 = vunpack.c.l.b16 %v71
    %v108 = vunpack.c.l.b16 %v72
    %v109 = vunpack.c.l.b16 %v73
    %v110 = vunpack.c.l.b16 %v74
    %v111 = vunpack.c.l.b16 %v75
    %v112 = vunpack.c.l.b16 %v76
    %v113 = vunpack.c.l.b16 %v77
    %v114 = vunpack.c.l.b16 %v78
    %v115 = vunpack.c.l.b16 %v79
    %v116 = vunpack.c.l.b16 %v80
    %v117 = vunpack.c.l.b16 %v81
    %v118 = vunpack.c.l.b16 %v82
    %v119 = vpack.c.b16 %v104, %v103
    %v120 = vpack.c.b16 %v106, %v105
    %v121 = vpack.c.b16 %v108, %v107
    %v122 = vpack.c.b16 %v110, %v109
    %v123 = vpack.c.b16 %v112, %v111
    %v124 = vpack.c.b16 %v114, %v113
    %v125 = vpack.c.b16 %v116, %v115
    %v126 = vpack.c.b16 %v118, %v117
    %135 = vmatpush.bf16.msra.mxu0 %v126
    %136 = vmatpush.bf16.msra.mxu0 %v125
    %137 = vmatpush.bf16.msra.mxu0 %v124
    %138 = vmatpush.bf16.msra.mxu0 %v123
    %139 = vmatpush.bf16.msra.mxu0 %v122
    %140 = vmatpush.bf16.msra.mxu0 %v121
    %141 = vmatpush.bf16.msra.mxu0 %v120
    %142 = vmatpush.bf16.msra.mxu0 %v119
    %143 = vmatmul.bf16.gmra.mxu0 %v66
    %v144 = vpop.f32.mrf.mxu0
    %v145 = vadd.f32 %v85, %v144
    %v146 = vpop.f32.mrf.mxu0
    %147 = vdwg.mxu0
    %v148 = vmax.f32 %v145, 0.0
    %v149 = vld [vmem:[#allocation7] sm:$0xf]
    %v150 = vld [vmem:[#allocation7 + $0x4] sm:$0xf]
    %v151 = vld [vmem:[#allocation7 + $0x8] sm:$0xf]
    %v152 = vld [vmem:[#allocation7 + $0xc] sm:$0xf]
    %v153 = vld [vmem:[#allocation7 + $0x10] sm:$0xf]
    %v154 = vld [vmem:[#allocation7 + $0x14] sm:$0xf]
    %v155 = vld [vmem:[#allocation7 + $0x18] sm:$0xf]
    %v156 = vld [vmem:[#allocation7 + $0x1c] sm:$0xf]
    %v157 = vld [vmem:[#allocation7 + $0x20] sm:$0xf]
    %v158 = vld [vmem:[#allocation7 + $0x24] sm:$0xf]
    %v159 = vld [vmem:[#allocation7 + $0x28] sm:$0xf]
    %v160 = vld [vmem:[#allocation7 + $0x2c] sm:$0xf]
    %v161 = vld [vmem:[#allocation7 + $0x30] sm:$0xf]
    %v162 = vld [vmem:[#allocation7 + $0x34] sm:$0xf]
    %v163 = vld [vmem:[#allocation7 + $0x38] sm:$0xf]
    %v164 = vld [vmem:[#allocation7 + $0x3c] sm:$0xf]
    %v165 = vld [vmem:[%s4] sm:$0x1]
    %v166 = vpack.c.bf16 %v148, %v148
    %v168 = vperm.slane %v165, 0
    %v186 = vunpack.c.l.b16 %v149
    %v187 = vunpack.c.l.b16 %v150
    %v188 = vunpack.c.l.b16 %v151
    %v189 = vunpack.c.l.b16 %v152
    %v190 = vunpack.c.l.b16 %v153
    %v191 = vunpack.c.l.b16 %v154
    %v192 = vunpack.c.l.b16 %v155
    %v193 = vunpack.c.l.b16 %v156
    %v194 = vunpack.c.l.b16 %v157
    %v195 = vunpack.c.l.b16 %v158
    %v196 = vunpack.c.l.b16 %v159
    %v197 = vunpack.c.l.b16 %v160
    %v198 = vunpack.c.l.b16 %v161
    %v199 = vunpack.c.l.b16 %v162
    %v200 = vunpack.c.l.b16 %v163
    %v201 = vunpack.c.l.b16 %v164
    %v202 = vpack.c.b16 %v187, %v186
    %v203 = vpack.c.b16 %v189, %v188
    %v204 = vpack.c.b16 %v191, %v190
    %v205 = vpack.c.b16 %v193, %v192
    %v206 = vpack.c.b16 %v195, %v194
    %v207 = vpack.c.b16 %v197, %v196
    %v208 = vpack.c.b16 %v199, %v198
    %v209 = vpack.c.b16 %v201, %v200
    %218 = vmatpush.bf16.msra.mxu0 %v209
    %219 = vmatpush.bf16.msra.mxu0 %v208
    %220 = vmatpush.bf16.msra.mxu0 %v207
    %221 = vmatpush.bf16.msra.mxu0 %v206
    %222 = vmatpush.bf16.msra.mxu0 %v205
    %223 = vmatpush.bf16.msra.mxu0 %v204
    %224 = vmatpush.bf16.msra.mxu0 %v203
    %225 = vmatpush.bf16.msra.mxu0 %v202
    %226 = vmatmul.bf16.gmra.mxu0 %v166
    %v227 = vpop.f32.mrf.mxu0
    %v228 = vadd.f32 %v168, %v227
    %v229 = vpop.f32.mrf.mxu0
    %230 = vdwg.mxu0
    %231 = vst [vmem:[#allocation8] sm:$0xff] %v228
    // Predicated region
    $region34: #{tpu_custom_call.1} parent=1 // pred_check
      _
    $region35: #{tpu_custom_call.1} parent=1 // pred_check_branch
      %233 = sbr.rel (0) target = $region37
    $region36: #{tpu_custom_call.1} parent=1 // pred_region
      %235 = vsyncadd [#allocation4], 0
      %s237 = sshll.u32 [#allocation8], 4
      %s238 = int_to_ptr.vmem [resolvable:$true] %s237
      %s239 = sshll.u32 %s5, 4
      %s240 = int_to_ptr.hbm [resolvable:$true] %s239
      %242 = dma.vmem_to_hbm [thread:$0]  %s238, 128, %s240, [#allocation4]
    $region37: #{tpu_custom_call.1} parent=1 // pred_fallthru
      _
    // Predicated region
    $region38: #{tpu_custom_call.1} parent=1 // pred_check
      _
    $region39: #{tpu_custom_call.1} parent=1 // pred_check_branch
      %244 = sbr.rel (0) target = $region41
    $region40: #{tpu_custom_call.1} parent=1 // pred_region
      %246 = dma.done [#allocation4], 128
    $region41: #{tpu_custom_call.1} parent=1 // pred_fallthru
      _
    %247 = vsyncpa [#allocation3], 1
    %248 = vsyncpa [#allocation6], 1
    %249 = vsyncpa [#allocation4], 1

</llo_original>
